<compile_context>
chip_gen: v5e
topology: v5e:2x2
jax: 0.10.0
libtpu: 0.0.40
codegen_flags: <defaults>
</compile_context>

<pallas_src>
import functools

import jax
import jax.numpy as jnp
from jax.experimental import pallas as pl
from jax.experimental.pallas import tpu as pltpu

_LANE = 128
_H_RESIDENT_BYTES = 16 * 1024 * 1024      # budget for a VMEM-resident H (bf16)
_VMEM_LIMIT_BYTES = 48 * 1024 * 1024      # explicit limit, below v7x's 64 MiB


def _round_up(v, m):
    return (v + m - 1) // m * m


def _pad2d(x, rows, cols):
    r, c = x.shape
    if r == rows and c == cols:
        return x
    return jnp.zeros((rows, cols), x.dtype).at[:r, :c].set(x)


# --------------------------------------------------------------------------
# Kernel 1: feature projection   P = Dinv @ (X @ W)    (bf16 in/out, f32 acc)
# --------------------------------------------------------------------------
def _project_kernel(x_ref, w_ref, dinv_ref, p_ref):
    h = jnp.dot(x_ref[...], w_ref[...], preferred_element_type=jnp.float32)
    p_ref[...] = (h * dinv_ref[...]).astype(p_ref.dtype)


def project(x, w, dinv, *, tile_m):
    n_pad, c_in_p = x.shape
    c_out_p = w.shape[1]
    # TODO(synk): K-tile this kernel when c_in_p is large enough that a
    #             (tile_m, c_in_p) bf16 tile pressures v7x's 64 MiB VMEM.
    return pl.pallas_call(
        _project_kernel,
        out_shape=jax.ShapeDtypeStruct((n_pad, c_out_p), jnp.bfloat16),
        grid_spec=pltpu.PrefetchScalarGridSpec(
            num_scalar_prefetch=0,
            grid=(n_pad // tile_m,),
            in_specs=[
                pl.BlockSpec((tile_m, c_in_p), lambda i: (i, 0)),    # X row tile (bf16)
                pl.BlockSpec((c_in_p, c_out_p), lambda i: (0, 0)),   # W resident (bf16)
                pl.BlockSpec((tile_m, 1), lambda i: (i, 0)),         # d^{-1/2} rows (f32)
            ],
            out_specs=pl.BlockSpec((tile_m, c_out_p), lambda i: (i, 0)),
        ),
        compiler_params=pltpu.CompilerParams(
            dimension_semantics=("parallel",),
            vmem_limit_bytes=_VMEM_LIMIT_BYTES,
        ),
    )(x, w, dinv)


# --------------------------------------------------------------------------
# Kernel 2: aggregation (K-tiled over (A+I) columns, f32 accumulation)
# --------------------------------------------------------------------------
def _load_a_bf16(a_ref):
    # int8 (or bf16) (A+I) tile -> bf16 for the MXU.  int8->f32->bf16 VPU
    # casts are free slack in this HBM-bound kernel.
    return a_ref[...].astype(jnp.float32).astype(jnp.bfloat16)


def _h_block(h_ref, k, *, tile_k, h_resident):
    if h_resident:
        start = pl.multiple_of(k * tile_k, _LANE)
        return h_ref[pl.ds(start, tile_k), :]
    return h_ref[...]


def _agg_fused_kernel(a_ref, h_ref, b_ref, dinv_ref, w_ref, o_ref, acc_ref, *,
                      tile_k, h_resident):
    """Intermediate layer + fused next-layer projection:
       P_next = Dinv @ ( relu( Dinv @ ((A+I) @ P) + b ) @ W_next )."""
    k = pl.program_id(1)

    @pl.when(k == 0)
    def _():
        acc_ref[...] = jnp.zeros_like(acc_ref)

    acc_ref[...] += jnp.dot(
        _load_a_bf16(a_ref),
        _h_block(h_ref, k, tile_k=tile_k, h_resident=h_resident),
        preferred_element_type=jnp.float32)

    @pl.when(k == pl.num_programs(1) - 1)
    def _():
        y = jnp.maximum(acc_ref[...] * dinv_ref[...] + b_ref[...], 0.0)  # layer output
        p = jnp.dot((y * dinv_ref[...]).astype(jnp.bfloat16), w_ref[...],
                    preferred_element_type=jnp.float32)                  # next projection
        o_ref[...] = p.astype(o_ref.dtype)


def _agg_final_kernel(a_ref, h_ref, b_ref, dinv_ref, o_ref, *, tile_k, h_resident):
    """Final layer: Y = Dinv @ ((A+I) @ P) + b, accumulated in the f32 output block."""
    k = pl.program_id(1)

    @pl.when(k == 0)
    def _():
        o_ref[...] = jnp.zeros_like(o_ref)

    o_ref[...] += jnp.dot(
        _load_a_bf16(a_ref),
        _h_block(h_ref, k, tile_k=tile_k, h_resident=h_resident),
        preferred_element_type=jnp.float32)

    @pl.when(k == pl.num_programs(1) - 1)
    def _():
        o_ref[...] = o_ref[...] * dinv_ref[...] + b_ref[...]


def _agg_in_specs(n_pad, c_in_p, tile_m, tile_k, h_resident):
    h_spec = (pl.BlockSpec((n_pad, c_in_p), lambda i, k: (0, 0)) if h_resident
              else pl.BlockSpec((tile_k, c_in_p), lambda i, k: (k, 0)))
    return [
        pl.BlockSpec((tile_m, tile_k), lambda i, k: (i, k)),   # (A+I) tile (int8/bf16)
        h_spec,                                                # P (bf16)
        pl.BlockSpec((1, c_in_p), lambda i, k: (0, 0)),        # bias (f32)
        pl.BlockSpec((tile_m, 1), lambda i, k: (i, 0)),        # d^{-1/2} rows (f32)
    ]


def aggregate_fused(a, h, b, dinv, w_next, *, tile_m, tile_k):
    n_pad = a.shape[0]
    c_in_p = h.shape[1]
    c_next_p = w_next.shape[1]
    h_resident = n_pad * c_in_p * 2 <= _H_RESIDENT_BYTES
    kernel = functools.partial(_agg_fused_kernel, tile_k=tile_k, h_resident=h_resident)
    in_specs = _agg_in_specs(n_pad, c_in_p, tile_m, tile_k, h_resident) + [
        pl.BlockSpec((c_in_p, c_next_p), lambda i, k: (0, 0)),  # W_{l+1} resident (bf16)
    ]
    return pl.pallas_call(
        kernel,
        out_shape=jax.ShapeDtypeStruct((n_pad, c_next_p), jnp.bfloat16),
        grid_spec=pltpu.PrefetchScalarGridSpec(
            num_scalar_prefetch=0,
            grid=(n_pad // tile_m, n_pad // tile_k),
            in_specs=in_specs,
            out_specs=pl.BlockSpec((tile_m, c_next_p), lambda i, k: (i, 0)),
            scratch_shapes=[pltpu.VMEM((tile_m, c_in_p), jnp.float32)],
        ),
        compiler_params=pltpu.CompilerParams(
            dimension_semantics=("parallel", "arbitrary"),
            vmem_limit_bytes=_VMEM_LIMIT_BYTES,
        ),
    )(a, h, b, dinv, w_next)


def aggregate_final(a, h, b, dinv, *, tile_m, tile_k):
    n_pad = a.shape[0]
    c_in_p = h.shape[1]
    h_resident = n_pad * c_in_p * 2 <= _H_RESIDENT_BYTES
    kernel = functools.partial(_agg_final_kernel, tile_k=tile_k, h_resident=h_resident)
    return pl.pallas_call(
        kernel,
        out_shape=jax.ShapeDtypeStruct((n_pad, c_in_p), jnp.float32),
        grid_spec=pltpu.PrefetchScalarGridSpec(
            num_scalar_prefetch=0,
            grid=(n_pad // tile_m, n_pad // tile_k),
            in_specs=_agg_in_specs(n_pad, c_in_p, tile_m, tile_k, h_resident),
            out_specs=pl.BlockSpec((tile_m, c_in_p), lambda i, k: (i, 0)),
        ),
        compiler_params=pltpu.CompilerParams(
            dimension_semantics=("parallel", "arbitrary"),
            vmem_limit_bytes=_VMEM_LIMIT_BYTES,
        ),
    )(a, h, b, dinv)


# --------------------------------------------------------------------------
# One-time adjacency preprocessing (hoisted out of the forward path)
# --------------------------------------------------------------------------
def preprocess_adj(adj, *, tile_n=512):
    """Builds the 1-byte (A+I) stream and the d^{-1/2} scale vector, padded."""
    n = adj.shape[0]
    # Tile must be a multiple of 128 and divide the padded node count.
    tile = max(_LANE, min(_round_up(int(tile_n), _LANE), _round_up(n, _LANE)))
    n_pad = _round_up(n, tile)

    a_tilde = adj.astype(jnp.float32) + jnp.eye(n, dtype=jnp.float32)
    deg = jnp.sum(a_tilde, axis=1)
    dinv = jnp.where(deg > 0, jax.lax.rsqrt(deg), 0.0).astype(jnp.float32)

    # Binary graphs (the usual GCN case): exact 1-byte stream; weighted: bf16.
    is_binary = bool(jnp.all((adj == 0) | (adj == 1)))
    a_dtype = jnp.int8 if is_binary else jnp.bfloat16

    a_pad = _pad2d(a_tilde, n_pad, n_pad).astype(a_dtype)
    dinv_pad = jnp.zeros((n_pad, 1), jnp.float32).at[:n, 0].set(dinv)
    return a_pad, dinv_pad, tile


# --------------------------------------------------------------------------
# Parameter init (matches GCNConv glorot weight + zero bias)
# --------------------------------------------------------------------------
def glorot(key, shape):
    fan_in, fan_out = shape
    limit = jnp.sqrt(6.0 / (fan_in + fan_out))
    return jax.random.uniform(key, shape, jnp.float32, -limit, limit)


def init_gcn_params(key, in_channels, hidden_channels, out_channels, num_layers=2):
    dims = [in_channels] + [hidden_channels] * (num_layers - 1) + [out_channels]
    params = []
    for i in range(num_layers):
        key, sub = jax.random.split(key)
        w = glorot(sub, (dims[i], dims[i + 1]))
        b = jnp.zeros((1, dims[i + 1]), jnp.float32)
        params.append((w, b))
    return params


# --------------------------------------------------------------------------
# Forward pass (eval mode: dropout = identity, batchnorm=False)
# --------------------------------------------------------------------------
def gcn_forward(x, a_pad, dinv_pad, params, *, tile):
    n, c_in = x.shape
    n_pad = a_pad.shape[0]
    c_out = params[-1][0].shape[1]
    num_layers = len(params)

    # Layer-0 projection:  P0 = Dinv @ (X @ W0)   (bf16).
    c_in_p = _round_up(c_in, _LANE)
    w0, _ = params[0]
    x_pad = _pad2d(x, n_pad, c_in_p).astype(jnp.bfloat16)
    w0_pad = _pad2d(w0, c_in_p, _round_up(w0.shape[1], _LANE)).astype(jnp.bfloat16)
    p = project(x_pad, w0_pad, dinv_pad, tile_m=tile)

    # Intermediate layers: aggregate + bias + relu + fused next-layer projection.
    for li in range(num_layers - 1):
        b = params[li][1]
        w_next = params[li + 1][0]
        c_hid_p = p.shape[1]
        c_next_p = _round_up(w_next.shape[1], _LANE)
        b_pad = _pad2d(b, 1, c_hid_p)
        w_next_pad = _pad2d(w_next, c_hid_p, c_next_p).astype(jnp.bfloat16)
        p = aggregate_fused(a_pad, p, b_pad, dinv_pad, w_next_pad,
                            tile_m=tile, tile_k=tile)

    # Final layer: aggregate only (no activation), f32 output.
    b_last_pad = _pad2d(params[-1][1], 1, p.shape[1])
    y = aggregate_final(a_pad, p, b_last_pad, dinv_pad, tile_m=tile, tile_k=tile)
    return y[:n, :c_out]


# --------------------------------------------------------------------------
# Plain-JAX reference helper (for the correctness check only)
# --------------------------------------------------------------------------
def gcn_norm(adj):
    n = adj.shape[0]
    a = adj + jnp.eye(n, dtype=adj.dtype)
    deg = jnp.sum(a, axis=1)
    d = jnp.where(deg > 0, jax.lax.rsqrt(deg), 0.0)
    return a * d[:, None] * d[None, :]


# --------------------------------------------------------------------------
if __name__ == "__main__":
    N = 128            # number of graph nodes
    IN_C = 16          # in_channels
    HID_C = 32         # hidden_channels
    OUT_C = 8          # out_channels

    key = jax.random.PRNGKey(0)
    k_x, k_adj, k_p = jax.random.split(key, 3)

    x = jax.random.normal(k_x, (N, IN_C), jnp.float32)
    # random symmetric 0/1 adjacency (no self loops; gcn_norm adds them)
    a = (jax.random.uniform(k_adj, (N, N)) < 0.05).astype(jnp.float32)
    adj = jnp.maximum(a, a.T) * (1.0 - jnp.eye(N, dtype=jnp.float32))

    params = init_gcn_params(k_p, IN_C, HID_C, OUT_C, num_layers=2)

    # One-time graph preprocessing (cached), then the Pallas forward.
    a_pad, dinv_pad, tile = preprocess_adj(adj, tile_n=512)
    out = gcn_forward(x, a_pad, dinv_pad, params, tile=tile)
    out = jax.block_until_ready(out)

    # Plain-JAX f32 reference; kernels use bf16 activations -> relaxed tolerance.
    adj_hat = gcn_norm(adj)
    h_ref = jnp.maximum(adj_hat @ (x @ params[0][0]) + params[0][1], 0.0)
    y_ref = adj_hat @ (h_ref @ params[1][0]) + params[1][1]
    assert out.shape == (N, OUT_C)
    assert jnp.allclose(out, y_ref, atol=5e-2, rtol=5e-2)

    print("KERNEL_OK")
</pallas_src>

<mosaic_0001>
module attributes {stable_mosaic.version = 11 : i64} {
  func.func @_project_kernel(%arg0: i32, %arg1: memref<128x128xbf16, #tpu.memory_space<vmem>>, %arg2: memref<128x128xbf16, #tpu.memory_space<vmem>>, %arg3: memref<128x1xf32, #tpu.memory_space<vmem>>, %arg4: memref<128x128xbf16, #tpu.memory_space<vmem>>) attributes {dimension_semantics = [#tpu.dimension_semantics<parallel>], iteration_bounds = array<i64: 1>, scalar_prefetch = 0 : i64, scratch_operands = 0 : i64, tpu.core_type = #tpu.core_type<tc>, window_params = [{transform_indices = @transform_0, window_bounds = array<i64: 128, 128>}, {pipeline_mode = #tpu.pipeline_mode<synchronous>, transform_indices = @transform_1, window_bounds = array<i64: 128, 128>}, {transform_indices = @transform_2, window_bounds = array<i64: 128, 1>}, {transform_indices = @transform_3, window_bounds = array<i64: 128, 128>}]} {
    %c0 = arith.constant 0 : index
    %c0_0 = arith.constant 0 : index
    %0 = vector.load %arg1[%c0, %c0_0] : memref<128x128xbf16, #tpu.memory_space<vmem>>, vector<128x128xbf16>
    %c0_1 = arith.constant 0 : index
    %c0_2 = arith.constant 0 : index
    %1 = vector.load %arg2[%c0_1, %c0_2] : memref<128x128xbf16, #tpu.memory_space<vmem>>, vector<128x128xbf16>
    %cst = arith.constant dense<0.000000e+00> : vector<128x128xf32>
    %2 = tpu.matmul %0, %1, %cst {dimension_numbers = #tpu.dot_dimension_numbers<[1], [0], [0], [1], [0, 0, 1, 1], [], []>} : vector<128x128xbf16>, vector<128x128xbf16>, vector<128x128xf32> -> vector<128x128xf32>
    %c0_3 = arith.constant 0 : index
    %c0_4 = arith.constant 0 : index
    %3 = vector.load %arg3[%c0_3, %c0_4] : memref<128x1xf32, #tpu.memory_space<vmem>>, vector<128x1xf32>
    %4 = vector.broadcast %3 : vector<128x1xf32> to vector<128x128xf32>
    %5 = arith.mulf %2, %4 : vector<128x128xf32>
    %6 = arith.truncf %5 : vector<128x128xf32> to vector<128x128xbf16>
    %c0_5 = arith.constant 0 : index
    %c0_6 = arith.constant 0 : index
    %7 = vector.load %arg4[%c0_5, %c0_6] : memref<128x128xbf16, #tpu.memory_space<vmem>>, vector<128x128xbf16>
    tpu.vector_store %arg4[%c0_5, %c0_6], %6 {strides = array<i32>} : memref<128x128xbf16, #tpu.memory_space<vmem>>, vector<128x128xbf16>,
    return
  }
  func.func @transform_0(%arg0: i32) -> (i32, i32) {
    %c0_i32 = arith.constant 0 : i32
    %c0_i32_0 = arith.constant 0 : i32
    return %arg0, %c0_i32 : i32, i32
  }
  func.func @transform_1(%arg0: i32) -> (i32, i32) {
    %c0_i32 = arith.constant 0 : i32
    %c0_i32_0 = arith.constant 0 : i32
    %c0_i32_1 = arith.constant 0 : i32
    return %c0_i32, %c0_i32_0 : i32, i32
  }
  func.func @transform_2(%arg0: i32) -> (i32, i32) {
    %c0_i32 = arith.constant 0 : i32
    %c0_i32_0 = arith.constant 0 : i32
    return %arg0, %c0_i32 : i32, i32
  }
  func.func @transform_3(%arg0: i32) -> (i32, i32) {
    %c0_i32 = arith.constant 0 : i32
    %c0_i32_0 = arith.constant 0 : i32
    return %arg0, %c0_i32 : i32, i32
  }
}

</mosaic_0001>

<llo_original>
// kernel: tpu_custom_call.1
$region0: #{tpu_custom_call.1}
  #allocation0 [shape = 'u32[]', space=smem, size = 0x4, offset = 0x4, fixed_abs, tag = 'smem constant byte address 0x4 - core index']
  #allocation1 [shape = 'u32[72,128]{1,0:T(1,128)}', space=vmem, size = 0x9000, scoped, tag = 'internal scratch']
  %s0 = inlined_call_operand.vmem [shape: bf16[128,128], index: 0, kind: input, shape index: {}]
  %s1 = inlined_call_operand.vmem [shape: bf16[128,128], index: 1, kind: input, shape index: {}]
  %s2 = inlined_call_operand.vmem [shape: f32[128,1], index: 2, kind: input, shape index: {}]
  %s3 = inlined_call_operand.hbm [shape: bf16[128,128], index: 3, kind: output, shape index: {}]
  %s4 = sld [smem:[#allocation0]]
  $region22: #{tpu_custom_call.1} parent=0
    _
  %s6 = ssub.s32 1, %s4
  %s7 = scalar_select 0, %s6, %s4
  $region1: #{tpu_custom_call.1} parent=0
    #allocation2 [shape = 'u8[32768]{0}', space=vmem, size = 0x8000, scoped, tag = 'output window, operand 0, single buffered']
    #allocation3 [shape = 's32[1]{0}', space=sflag, size = 0x4, scoped, tag = 'scoped memory for tpu_custom_call.1']
    %8 = vsyncpa [#allocation3], 0
    // Predicated region
    $region2: #{tpu_custom_call.1} parent=1 // pred_check
      _
    $region3: #{tpu_custom_call.1} parent=1 // pred_check_branch
      %10 = sbr.rel (0) target = $region5
    $region4: #{tpu_custom_call.1} parent=1 // pred_region
      _
    $region5: #{tpu_custom_call.1} parent=1 // pred_fallthru
      _
    // Predicated region
    $region6: #{tpu_custom_call.1} parent=1 // pred_check
      _
    $region7: #{tpu_custom_call.1} parent=1 // pred_check_branch
      %12 = sbr.rel (0) target = $region9
    $region8: #{tpu_custom_call.1} parent=1 // pred_region
      _
    $region9: #{tpu_custom_call.1} parent=1 // pred_fallthru
      _
    // Predicated region
    $region10: #{tpu_custom_call.1} parent=1 // pred_check
      _
    $region11: #{tpu_custom_call.1} parent=1 // pred_check_branch
      %14 = sbr.rel (0) target = $region13
    $region12: #{tpu_custom_call.1} parent=1 // pred_region
      _
    $region13: #{tpu_custom_call.1} parent=1 // pred_fallthru
      _
    %v15 = vld [vmem:[%s0] sm:$0xf]
    %v16 = vld [vmem:[%s0 + $0x4] sm:$0xf]
    %v17 = vld [vmem:[%s0 + $0x8] sm:$0xf]
    %v18 = vld [vmem:[%s0 + $0xc] sm:$0xf]
    %v19 = vld [vmem:[%s0 + $0x10] sm:$0xf]
    %v20 = vld [vmem:[%s0 + $0x14] sm:$0xf]
    %v21 = vld [vmem:[%s0 + $0x18] sm:$0xf]
    %v22 = vld [vmem:[%s0 + $0x1c] sm:$0xf]
    %v23 = vld [vmem:[%s0 + $0x20] sm:$0xf]
    %v24 = vld [vmem:[%s0 + $0x24] sm:$0xf]
    %v25 = vld [vmem:[%s0 + $0x28] sm:$0xf]
    %v26 = vld [vmem:[%s0 + $0x2c] sm:$0xf]
    %v27 = vld [vmem:[%s0 + $0x30] sm:$0xf]
    %v28 = vld [vmem:[%s0 + $0x34] sm:$0xf]
    %v29 = vld [vmem:[%s0 + $0x38] sm:$0xf]
    %v30 = vld [vmem:[%s0 + $0x3c] sm:$0xf]
    %v31 = vld [vmem:[%s1] sm:$0xf]
    %v32 = vld [vmem:[%s1 + $0x4] sm:$0xf]
    %v33 = vld [vmem:[%s1 + $0x8] sm:$0xf]
    %v34 = vld [vmem:[%s1 + $0xc] sm:$0xf]
    %v35 = vld [vmem:[%s1 + $0x10] sm:$0xf]
    %v36 = vld [vmem:[%s1 + $0x14] sm:$0xf]
    %v37 = vld [vmem:[%s1 + $0x18] sm:$0xf]
    %v38 = vld [vmem:[%s1 + $0x1c] sm:$0xf]
    %v39 = vld [vmem:[%s1 + $0x20] sm:$0xf]
    %v40 = vld [vmem:[%s1 + $0x24] sm:$0xf]
    %v41 = vld [vmem:[%s1 + $0x28] sm:$0xf]
    %v42 = vld [vmem:[%s1 + $0x2c] sm:$0xf]
    %v43 = vld [vmem:[%s1 + $0x30] sm:$0xf]
    %v44 = vld [vmem:[%s1 + $0x34] sm:$0xf]
    %v45 = vld [vmem:[%s1 + $0x38] sm:$0xf]
    %v46 = vld [vmem:[%s1 + $0x3c] sm:$0xf]
    %v63 = vunpack.c.l.b16 %v15
    %v64 = vunpack.c.l.b16 %v16
    %v65 = vunpack.c.l.b16 %v17
    %v66 = vunpack.c.l.b16 %v18
    %v67 = vunpack.c.l.b16 %v19
    %v68 = vunpack.c.l.b16 %v20
    %v69 = vunpack.c.l.b16 %v21
    %v70 = vunpack.c.l.b16 %v22
    %v71 = vunpack.c.l.b16 %v23
    %v72 = vunpack.c.l.b16 %v24
    %v73 = vunpack.c.l.b16 %v25
    %v74 = vunpack.c.l.b16 %v26
    %v75 = vunpack.c.l.b16 %v27
    %v76 = vunpack.c.l.b16 %v28
    %v77 = vunpack.c.l.b16 %v29
    %v78 = vunpack.c.l.b16 %v30
    %v79 = vpack.c.b16 %v64, %v63
    %v80 = vpack.c.b16 %v66, %v65
    %v81 = vpack.c.b16 %v68, %v67
    %v82 = vpack.c.b16 %v70, %v69
    %v83 = vpack.c.b16 %v72, %v71
    %v84 = vpack.c.b16 %v74, %v73
    %v85 = vpack.c.b16 %v76, %v75
    %v86 = vpack.c.b16 %v78, %v77
    %v111 = vunpack.c.l.b16 %v31
    %v112 = vunpack.c.l.b16 %v32
    %v113 = vunpack.c.l.b16 %v33
    %v114 = vunpack.c.l.b16 %v34
    %v115 = vunpack.c.l.b16 %v35
    %v116 = vunpack.c.l.b16 %v36
    %v117 = vunpack.c.l.b16 %v37
    %v118 = vunpack.c.l.b16 %v38
    %v119 = vunpack.c.l.b16 %v39
    %v120 = vunpack.c.l.b16 %v40
    %v121 = vunpack.c.l.b16 %v41
    %v122 = vunpack.c.l.b16 %v42
    %v123 = vunpack.c.l.b16 %v43
    %v124 = vunpack.c.l.b16 %v44
    %v125 = vunpack.c.l.b16 %v45
    %v126 = vunpack.c.l.b16 %v46
    %v127 = vpack.c.b16 %v112, %v111
    %v128 = vpack.c.b16 %v114, %v113
    %v129 = vpack.c.b16 %v116, %v115
    %v130 = vpack.c.b16 %v118, %v117
    %v131 = vpack.c.b16 %v120, %v119
    %v132 = vpack.c.b16 %v122, %v121
    %v133 = vpack.c.b16 %v124, %v123
    %v134 = vpack.c.b16 %v126, %v125
    %143 = vmatpush.bf16.msra.mxu0 %v134
    %144 = vmatpush.bf16.msra.mxu0 %v133
    %145 = vmatpush.bf16.msra.mxu0 %v132
    %146 = vmatpush.bf16.msra.mxu0 %v131
    %147 = vmatpush.bf16.msra.mxu0 %v130
    %148 = vmatpush.bf16.msra.mxu0 %v129
    %149 = vmatpush.bf16.msra.mxu0 %v128
    %150 = vmatpush.bf16.msra.mxu0 %v127
    %151 = vmatmul.bf16.gmra.mxu0 %v79
    %v152 = vpop.f32.mrf.mxu0
    %v153 = vadd.f32 0.0, %v152
    %v154 = vpop.f32.mrf.mxu0
    %v155 = vadd.f32 0.0, %v154
    %156 = vmatmul.bf16.gmra.mxu0 %v80
    %v157 = vpop.f32.mrf.mxu0
    %v158 = vadd.f32 0.0, %v157
    %v159 = vpop.f32.mrf.mxu0
    %v160 = vadd.f32 0.0, %v159
    %161 = vmatmul.bf16.gmra.mxu0 %v81
    %v162 = vpop.f32.mrf.mxu0
    %v163 = vadd.f32 0.0, %v162
    %v164 = vpop.f32.mrf.mxu0
    %v165 = vadd.f32 0.0, %v164
    %166 = vmatmul.bf16.gmra.mxu0 %v82
    %v167 = vpop.f32.mrf.mxu0
    %v168 = vadd.f32 0.0, %v167
    %v169 = vpop.f32.mrf.mxu0
    %v170 = vadd.f32 0.0, %v169
    %171 = vmatmul.bf16.gmra.mxu0 %v83
    %v172 = vpop.f32.mrf.mxu0
    %v173 = vadd.f32 0.0, %v172
    %v174 = vpop.f32.mrf.mxu0
    %v175 = vadd.f32 0.0, %v174
    %176 = vmatmul.bf16.gmra.mxu0 %v84
    %v177 = vpop.f32.mrf.mxu0
    %v178 = vadd.f32 0.0, %v177
    %v179 = vpop.f32.mrf.mxu0
    %v180 = vadd.f32 0.0, %v179
    %181 = vmatmul.bf16.gmra.mxu0 %v85
    %v182 = vpop.f32.mrf.mxu0
    %v183 = vadd.f32 0.0, %v182
    %v184 = vpop.f32.mrf.mxu0
    %v185 = vadd.f32 0.0, %v184
    %186 = vmatmul.bf16.gmra.mxu0 %v86
    %v187 = vpop.f32.mrf.mxu0
    %v188 = vadd.f32 0.0, %v187
    %v189 = vpop.f32.mrf.mxu0
    %v190 = vadd.f32 0.0, %v189
    %191 = vdwg.mxu0
    %v192 = vld [vmem:[%s2] sm:$0xff]
    %v193 = vld [vmem:[%s2 + $0x8] sm:$0xff]
    %v194 = vld [vmem:[%s2 + $0x10] sm:$0xff]
    %v195 = vld [vmem:[%s2 + $0x18] sm:$0xff]
    %v196 = vld [vmem:[%s2 + $0x20] sm:$0xff]
    %v197 = vld [vmem:[%s2 + $0x28] sm:$0xff]
    %v198 = vld [vmem:[%s2 + $0x30] sm:$0xff]
    %v199 = vld [vmem:[%s2 + $0x38] sm:$0xff]
    %v200 = vld [vmem:[%s2 + $0x40] sm:$0xff]
    %v201 = vld [vmem:[%s2 + $0x48] sm:$0xff]
    %v202 = vld [vmem:[%s2 + $0x50] sm:$0xff]
    %v203 = vld [vmem:[%s2 + $0x58] sm:$0xff]
    %v204 = vld [vmem:[%s2 + $0x60] sm:$0xff]
    %v205 = vld [vmem:[%s2 + $0x68] sm:$0xff]
    %v206 = vld [vmem:[%s2 + $0x70] sm:$0xff]
    %v207 = vld [vmem:[%s2 + $0x78] sm:$0xff]
    %209 = vset.pattern.permute.xlu0 0
    %210 = vperm.xlu0 %209, %v192
    %v211 = vpop.permute.xlu0 %210
    %214 = vset.pattern.permute.xlu0 0
    %215 = vperm.xlu0 %214, %v193
    %v216 = vpop.permute.xlu0 %215
    %219 = vset.pattern.permute.xlu0 0
    %220 = vperm.xlu0 %219, %v194
    %v221 = vpop.permute.xlu0 %220
    %224 = vset.pattern.permute.xlu0 0
    %225 = vperm.xlu0 %224, %v195
    %v226 = vpop.permute.xlu0 %225
    %229 = vset.pattern.permute.xlu0 0
    %230 = vperm.xlu0 %229, %v196
    %v231 = vpop.permute.xlu0 %230
    %234 = vset.pattern.permute.xlu0 0
    %235 = vperm.xlu0 %234, %v197
    %v236 = vpop.permute.xlu0 %235
    %239 = vset.pattern.permute.xlu0 0
    %240 = vperm.xlu0 %239, %v198
    %v241 = vpop.permute.xlu0 %240
    %244 = vset.pattern.permute.xlu0 0
    %245 = vperm.xlu0 %244, %v199
    %v246 = vpop.permute.xlu0 %245
    %249 = vset.pattern.permute.xlu0 0
    %250 = vperm.xlu0 %249, %v200
    %v251 = vpop.permute.xlu0 %250
    %254 = vset.pattern.permute.xlu0 0
    %255 = vperm.xlu0 %254, %v201
    %v256 = vpop.permute.xlu0 %255
    %259 = vset.pattern.permute.xlu0 0
    %260 = vperm.xlu0 %259, %v202
    %v261 = vpop.permute.xlu0 %260
    %264 = vset.pattern.permute.xlu0 0
    %265 = vperm.xlu0 %264, %v203
    %v266 = vpop.permute.xlu0 %265
    %269 = vset.pattern.permute.xlu0 0
    %270 = vperm.xlu0 %269, %v204
    %v271 = vpop.permute.xlu0 %270
    %274 = vset.pattern.permute.xlu0 0
    %275 = vperm.xlu0 %274, %v205
    %v276 = vpop.permute.xlu0 %275
    %279 = vset.pattern.permute.xlu0 0
    %280 = vperm.xlu0 %279, %v206
    %v281 = vpop.permute.xlu0 %280
    %284 = vset.pattern.permute.xlu0 0
    %285 = vperm.xlu0 %284, %v207
    %v286 = vpop.permute.xlu0 %285
    %v288 = vmul.f32 %v153, %v211
    %v289 = vmul.f32 %v155, %v216
    %v290 = vmul.f32 %v158, %v221
    %v291 = vmul.f32 %v160, %v226
    %v292 = vmul.f32 %v163, %v231
    %v293 = vmul.f32 %v165, %v236
    %v294 = vmul.f32 %v168, %v241
    %v295 = vmul.f32 %v170, %v246
    %v296 = vmul.f32 %v173, %v251
    %v297 = vmul.f32 %v175, %v256
    %v298 = vmul.f32 %v178, %v261
    %v299 = vmul.f32 %v180, %v266
    %v300 = vmul.f32 %v183, %v271
    %v301 = vmul.f32 %v185, %v276
    %v302 = vmul.f32 %v188, %v281
    %v303 = vmul.f32 %v190, %v286
    %v304 = vpack.c.bf16 %v288, %v288
    %v305 = vpack.c.bf16 %v289, %v289
    %v306 = vpack.c.bf16 %v290, %v290
    %v307 = vpack.c.bf16 %v291, %v291
    %v308 = vpack.c.bf16 %v292, %v292
    %v309 = vpack.c.bf16 %v293, %v293
    %v310 = vpack.c.bf16 %v294, %v294
    %v311 = vpack.c.bf16 %v295, %v295
    %v312 = vpack.c.bf16 %v296, %v296
    %v313 = vpack.c.bf16 %v297, %v297
    %v314 = vpack.c.bf16 %v298, %v298
    %v315 = vpack.c.bf16 %v299, %v299
    %v316 = vpack.c.bf16 %v300, %v300
    %v317 = vpack.c.bf16 %v301, %v301
    %v318 = vpack.c.bf16 %v302, %v302
    %v319 = vpack.c.bf16 %v303, %v303
    %320 = vst [vmem:[#allocation2] sm:$0xf] %v304
    %321 = vst [vmem:[#allocation2 + $0x4] sm:$0xf] %v305
    %322 = vst [vmem:[#allocation2 + $0x8] sm:$0xf] %v306
    %323 = vst [vmem:[#allocation2 + $0xc] sm:$0xf] %v307
    %324 = vst [vmem:[#allocation2 + $0x10] sm:$0xf] %v308
    %325 = vst [vmem:[#allocation2 + $0x14] sm:$0xf] %v309
    %326 = vst [vmem:[#allocation2 + $0x18] sm:$0xf] %v310
    %327 = vst [vmem:[#allocation2 + $0x1c] sm:$0xf] %v311
    %328 = vst [vmem:[#allocation2 + $0x20] sm:$0xf] %v312
    %329 = vst [vmem:[#allocation2 + $0x24] sm:$0xf] %v313
    %330 = vst [vmem:[#allocation2 + $0x28] sm:$0xf] %v314
    %331 = vst [vmem:[#allocation2 + $0x2c] sm:$0xf] %v315
    %332 = vst [vmem:[#allocation2 + $0x30] sm:$0xf] %v316
    %333 = vst [vmem:[#allocation2 + $0x34] sm:$0xf] %v317
    %334 = vst [vmem:[#allocation2 + $0x38] sm:$0xf] %v318
    %335 = vst [vmem:[#allocation2 + $0x3c] sm:$0xf] %v319
    // Predicated region
    $region14: #{tpu_custom_call.1} parent=1 // pred_check
      _
    $region15: #{tpu_custom_call.1} parent=1 // pred_check_branch
      %337 = sbr.rel (0) target = $region17
    $region16: #{tpu_custom_call.1} parent=1 // pred_region
      %339 = vsyncadd [#allocation3], 0
      %s340 = sshll.u32 [#allocation2], 4
      %s341 = int_to_ptr.vmem [resolvable:$true] %s340
      %s342 = sshll.u32 %s3, 4
      %s343 = int_to_ptr.hbm [resolvable:$true] %s342
      %348 = dma.vmem_to_hbm [thread:$0]  %s341, 1024, %s343, [#allocation3], 64, 64, 4
    $region17: #{tpu_custom_call.1} parent=1 // pred_fallthru
      _
    // Predicated region
    $region18: #{tpu_custom_call.1} parent=1 // pred_check
      _
    $region19: #{tpu_custom_call.1} parent=1 // pred_check_branch
      %350 = sbr.rel (0) target = $region21
    $region20: #{tpu_custom_call.1} parent=1 // pred_region
      %352 = dma.done [#allocation3], 1024
    $region21: #{tpu_custom_call.1} parent=1 // pred_fallthru
      _
    %353 = vsyncpa [#allocation3], 1

</llo_original>
